<compile_context>
chip_gen: v6e
topology: v6e:2x2x1
jax: 0.10.0
libtpu: 0.0.40
codegen_flags: <defaults>
</compile_context>

<pallas_src>
import functools

import jax
import jax.numpy as jnp
import numpy as np
from jax.experimental import pallas as pl
from jax.experimental.pallas import tpu as pltpu


def _round_up(x, m):
    return ((x + m - 1) // m) * m


# ----------------------------------------------------------------------------
# Kernel: copy the first `f` columns of a (tm, read_w) tile into (tm, f).
# ----------------------------------------------------------------------------
def _chomp_kernel(x_ref, o_ref):
    f = o_ref.shape[-1]                       # static
    if x_ref.shape[-1] == f:
        o_ref[...] = x_ref[...]
    else:
        o_ref[...] = x_ref[:, :f]


def _pick_tile_rows(M, read_w, itemsize, *, block_bytes=4 << 20,
                    min_block_bytes=512 << 10, target_steps=8):
    """Row-tile size: sublane-packing aligned, ~block_bytes per input block,
    re-split for megacore balance while blocks stay >= min_block_bytes."""
    pack = 8 * max(1, 4 // max(1, itemsize))          # 8 f32, 16 bf16, 32 i8
    row_bytes = max(1, read_w * itemsize)

    tm = max(pack, (block_bytes // row_bytes) // pack * pack)
    tm = min(tm, _round_up(M, pack))                  # never bigger than data

    # Give the v7x megacore enough steps to balance, but keep blocks chunky.
    while (tm > pack
           and -(-M // tm) < target_steps
           and (tm // 2) * row_bytes >= min_block_bytes):
        tm = max(pack, ((tm // 2) // pack) * pack)
    return tm


# ----------------------------------------------------------------------------
# Wrapper: Chomp_F forward.
# ----------------------------------------------------------------------------
def chomp_f_forward(x, f):
    """Equivalent of Chomp_F(f).forward: returns x[:, :, :, 0:f]."""
    N, C, H, W = x.shape
    assert 0 < f <= W, "chomp width must satisfy 0 < f <= W"

    M = N * C * H
    x2 = x.reshape(M, W)                      # free, row-major contiguous
    itemsize = x.dtype.itemsize

    # Only read the columns we need, rounded up to a legal 128-lane multiple.
    read_w = W if _round_up(f, 128) >= W else _round_up(f, 128)

    tm = _pick_tile_rows(M, read_w, itemsize)
    grid = (pl.cdiv(M, tm),)                  # ragged last tile handled by Pallas

    # Double-buffered working set (input + output blocks), plus headroom.
    working = 2 * tm * (read_w + f) * itemsize
    vmem_limit = int(min(max(working + (2 << 20), 16 << 20), 56 << 20))

    out = pl.pallas_call(
        _chomp_kernel,
        out_shape=jax.ShapeDtypeStruct((M, f), x.dtype),
        grid=grid,
        in_specs=[
            # lane dim = read_w (multiple of 128, or == W) -> legal block;
            # contiguous-ish HBM reads of only the kept columns.
            pl.BlockSpec((tm, read_w), lambda i: (i, 0)),
        ],
        # lane dim = f equals full output width -> contiguous HBM writes.
        out_specs=pl.BlockSpec((tm, f), lambda i: (i, 0)),
        compiler_params=pltpu.CompilerParams(
            dimension_semantics=("parallel",),        # megacore sharding (v7x)
            vmem_limit_bytes=vmem_limit),
        cost_estimate=pl.CostEstimate(
            flops=0, transcendentals=0,
            bytes_accessed=M * (read_w + f) * itemsize),
    )(x2)

    return out.reshape(N, C, H, f)


# TODO(synk): none — the module is a pure slice; everything maps to Pallas.

if __name__ == "__main__":
    key = jax.random.PRNGKey(0)
    N, C, H, W = 2, 4, 16, 16
    f = 8

    x = jax.random.normal(key, (N, C, H, W), dtype=jnp.float32)

    fwd = jax.jit(functools.partial(chomp_f_forward, f=f))
    out = jax.block_until_ready(fwd(x))

    ref = x[:, :, :, :f]
    assert out.shape == ref.shape == (N, C, H, f)
    np.testing.assert_array_equal(np.asarray(out), np.asarray(ref))
    print("KERNEL_OK")
</pallas_src>

<mosaic_0001>
module attributes {stable_mosaic.version = 11 : i64} {
  func.func @_chomp_kernel(%arg0: i32, %arg1: memref<128x16xf32, #tpu.memory_space<vmem>>, %arg2: memref<128x8xf32, #tpu.memory_space<vmem>>) attributes {dimension_semantics = [#tpu.dimension_semantics<parallel>], iteration_bounds = array<i64: 1>, scalar_prefetch = 0 : i64, scratch_operands = 0 : i64, tpu.core_type = #tpu.core_type<tc>, window_params = [{transform_indices = @transform_0, window_bounds = array<i64: 128, 16>}, {transform_indices = @transform_1, window_bounds = array<i64: 128, 8>}]} {
    %c0 = arith.constant 0 : index
    %c0_0 = arith.constant 0 : index
    %0 = vector.load %arg1[%c0, %c0_0] : memref<128x16xf32, #tpu.memory_space<vmem>>, vector<128x8xf32>
    %c0_1 = arith.constant 0 : index
    %c0_2 = arith.constant 0 : index
    %1 = vector.load %arg2[%c0_1, %c0_2] : memref<128x8xf32, #tpu.memory_space<vmem>>, vector<128x8xf32>
    tpu.vector_store %arg2[%c0_1, %c0_2], %0 {strides = array<i32>} : memref<128x8xf32, #tpu.memory_space<vmem>>, vector<128x8xf32>,
    return
  }
  func.func @transform_0(%arg0: i32) -> (i32, i32) {
    %c0_i32 = arith.constant 0 : i32
    %c0_i32_0 = arith.constant 0 : i32
    return %arg0, %c0_i32 : i32, i32
  }
  func.func @transform_1(%arg0: i32) -> (i32, i32) {
    %c0_i32 = arith.constant 0 : i32
    %c0_i32_0 = arith.constant 0 : i32
    return %arg0, %c0_i32 : i32, i32
  }
}

</mosaic_0001>

<llo_original>
// kernel: chomp_f_forward.1
$region0: #{chomp_f_forward.1}
  #allocation0 [shape = 'u32[]', space=smem, size = 0x4, offset = 0x4, fixed_abs, tag = 'smem constant byte address 0x4 - core index']
  #allocation1 [shape = 'u32[144,128]{1,0:T(1,128)}', space=vmem, size = 0x12000, scoped, tag = 'internal scratch']
  %s0 = inlined_call_operand.hbm [shape: f32[128,16], index: 0, kind: input, shape index: {}]
  %s1 = inlined_call_operand.vmem [shape: f32[128,8], index: 1, kind: output, shape index: {}]
  %s2 = sld [smem:[#allocation0]]
  $region18: #{chomp_f_forward.1} parent=0
    _
  %s4 = ssub.s32 1, %s2
  %s5 = scalar_select 0, %s4, %s2
  $region1: #{chomp_f_forward.1} parent=0
    #allocation2 [shape = 'u8[65536]{0}', space=vmem, size = 0x10000, scoped, tag = 'input window, operand 0, single buffered']
    #allocation3 [shape = 's32[1]{0}', space=sflag, size = 0x4, scoped, tag = 'scoped memory for chomp_f_forward.1']
    %6 = vsyncpa [#allocation3], 0
    // Predicated region
    $region2: #{chomp_f_forward.1} parent=1 // pred_check
      _
    $region3: #{chomp_f_forward.1} parent=1 // pred_check_branch
      %8 = sbr.rel (0) target = $region5
    $region4: #{chomp_f_forward.1} parent=1 // pred_region
      %s10 = ssub.s32 2048, 2048
      %11 = vsyncadd [#allocation3], %s10
      %s12 = sshll.u32 [#allocation2], 4
      %s13 = int_to_ptr.vmem [resolvable:$true] %s12
      %18 = dma.hbm_to_vmem [thread:$0]  %s0, 2048, %s13, [#allocation3], 128, 128, 8
    $region5: #{chomp_f_forward.1} parent=1 // pred_fallthru
      _
    // Predicated region
    $region6: #{chomp_f_forward.1} parent=1 // pred_check
      _
    $region7: #{chomp_f_forward.1} parent=1 // pred_check_branch
      %20 = sbr.rel (0) target = $region9
    $region8: #{chomp_f_forward.1} parent=1 // pred_region
      %21 = dma.done [#allocation3], 2048
    $region9: #{chomp_f_forward.1} parent=1 // pred_fallthru
      _
    %v22 = vld [vmem:[#allocation2] sm:$0xff]
    %v23 = vld [vmem:[#allocation2 + $0x8] sm:$0xff]
    %v24 = vld [vmem:[#allocation2 + $0x10] sm:$0xff]
    %v25 = vld [vmem:[#allocation2 + $0x18] sm:$0xff]
    %v26 = vld [vmem:[#allocation2 + $0x20] sm:$0xff]
    %v27 = vld [vmem:[#allocation2 + $0x28] sm:$0xff]
    %v28 = vld [vmem:[#allocation2 + $0x30] sm:$0xff]
    %v29 = vld [vmem:[#allocation2 + $0x38] sm:$0xff]
    %v30 = vld [vmem:[#allocation2 + $0x40] sm:$0xff]
    %v31 = vld [vmem:[#allocation2 + $0x48] sm:$0xff]
    %v32 = vld [vmem:[#allocation2 + $0x50] sm:$0xff]
    %v33 = vld [vmem:[#allocation2 + $0x58] sm:$0xff]
    %v34 = vld [vmem:[#allocation2 + $0x60] sm:$0xff]
    %v35 = vld [vmem:[#allocation2 + $0x68] sm:$0xff]
    %v36 = vld [vmem:[#allocation2 + $0x70] sm:$0xff]
    %v37 = vld [vmem:[#allocation2 + $0x78] sm:$0xff]
    %vm38 = vcmask 64512
    %39 = vst.msk [vmem:[%s1] sm:$0xff] %vm38, %v22
    %40 = vst.msk [vmem:[%s1 + $0x8] sm:$0xff] %vm38, %v23
    %41 = vst.msk [vmem:[%s1 + $0x10] sm:$0xff] %vm38, %v24
    %42 = vst.msk [vmem:[%s1 + $0x18] sm:$0xff] %vm38, %v25
    %43 = vst.msk [vmem:[%s1 + $0x20] sm:$0xff] %vm38, %v26
    %44 = vst.msk [vmem:[%s1 + $0x28] sm:$0xff] %vm38, %v27
    %45 = vst.msk [vmem:[%s1 + $0x30] sm:$0xff] %vm38, %v28
    %46 = vst.msk [vmem:[%s1 + $0x38] sm:$0xff] %vm38, %v29
    %47 = vst.msk [vmem:[%s1 + $0x40] sm:$0xff] %vm38, %v30
    %48 = vst.msk [vmem:[%s1 + $0x48] sm:$0xff] %vm38, %v31
    %49 = vst.msk [vmem:[%s1 + $0x50] sm:$0xff] %vm38, %v32
    %50 = vst.msk [vmem:[%s1 + $0x58] sm:$0xff] %vm38, %v33
    %51 = vst.msk [vmem:[%s1 + $0x60] sm:$0xff] %vm38, %v34
    %52 = vst.msk [vmem:[%s1 + $0x68] sm:$0xff] %vm38, %v35
    %53 = vst.msk [vmem:[%s1 + $0x70] sm:$0xff] %vm38, %v36
    %54 = vst.msk [vmem:[%s1 + $0x78] sm:$0xff] %vm38, %v37
    // Predicated region
    $region10: #{chomp_f_forward.1} parent=1 // pred_check
      _
    $region11: #{chomp_f_forward.1} parent=1 // pred_check_branch
      %56 = sbr.rel (0) target = $region13
    $region12: #{chomp_f_forward.1} parent=1 // pred_region
      _
    $region13: #{chomp_f_forward.1} parent=1 // pred_fallthru
      _
    // Predicated region
    $region14: #{chomp_f_forward.1} parent=1 // pred_check
      _
    $region15: #{chomp_f_forward.1} parent=1 // pred_check_branch
      %58 = sbr.rel (0) target = $region17
    $region16: #{chomp_f_forward.1} parent=1 // pred_region
      _
    $region17: #{chomp_f_forward.1} parent=1 // pred_fallthru
      _
    %59 = vsyncpa [#allocation3], 1

</llo_original>
